<compile_context>
chip_gen: v5e
topology: v5e:2x2
jax: 0.10.0
libtpu: 0.0.40
codegen_flags: <defaults>
</compile_context>

<pallas_src>
import math

import jax
import jax.numpy as jnp
from jax.experimental import pallas as pl
from jax.experimental.pallas import tpu as pltpu

_LANE = 128
_SUBLANE_32BIT = 8
_TARGET_BLOCK_BYTES = 2 * 1024 * 1024  # per buffer; safe on v5e/v6e/v7x defaults


def _copy_kernel(x_ref, o_ref):
    # Single whole-tile assignment (straight vld -> vst stream).  Any fused
    # elementwise work (scale / cast / bias / activation) should be applied to
    # the full (tn, td) tile right here — no per-row loops, masks, or
    # tile-crossing slices (those materialize VMEM copies).
    o_ref[...] = x_ref[...]


def _min_sublanes(itemsize: int) -> int:
    """Packed-dtype sublane minimum: 8 for 32-bit, 16 for bf16/f16, 32 for int8/fp8."""
    return _SUBLANE_32BIT * max(1, 4 // itemsize)


def _pick_tile(n: int, d: int, itemsize: int, target_bytes: int):
    """Pick a (tn, td) block: lane tile a multiple of 128 (or full d), row tile a
    multiple of the packed sublane minimum (or full n), ~target_bytes/buffer."""
    min_sub = _min_sublanes(itemsize)
    budget = max(1, target_bytes // itemsize)  # elements per block

    td = (budget // min_sub) // _LANE * _LANE
    td = max(_LANE, td)
    if td >= d:
        td = d  # full extent is always legal

    tn = budget // td
    tn = max(min_sub, (tn // min_sub) * min_sub)
    if tn >= n:
        tn = n  # full extent is always legal
    return tn, td


def flatten(x: jax.Array) -> jax.Array:
    """Flatten.forward: x.view(-1, prod(x.shape[1:])).

    Pure Flatten is a metadata-only collapse; a reshape is the optimal
    implementation (no HBM round trip), so no kernel is launched here.
    """
    n = x.shape[0]
    d = math.prod(x.shape[1:]) if x.ndim > 1 else 1
    return jnp.reshape(x, (n, d))


def flatten_pallas(x: jax.Array, *, target_block_bytes: int = _TARGET_BLOCK_BYTES) -> jax.Array:
    """Flatten via a lane-dense tiled Pallas copy.

    Only useful as a host for fused elementwise work; for plain Flatten use
    `flatten()` above.  Blocks directly over the (n, d) output view so only a
    single (possibly unavoidable) relayout brackets the kernel.
    """
    n = x.shape[0]
    d = math.prod(x.shape[1:]) if x.ndim > 1 else 1

    # Not lane-dense as (n, d): the metadata-only reshape is exact and strictly
    # faster than any masked-store kernel.
    if n * d == 0 or d % _LANE != 0:
        return jnp.reshape(x, (n, d))

    # Single collapse to the output view; the kernel's output already has the
    # final (n, d) shape, so there is no reshape after the call.
    x2 = jnp.reshape(x, (n, d))

    itemsize = jnp.dtype(x.dtype).itemsize
    tn, td = _pick_tile(n, d, itemsize, target_block_bytes)
    grid = (pl.cdiv(n, tn), pl.cdiv(d, td))

    return pl.pallas_call(
        _copy_kernel,
        out_shape=jax.ShapeDtypeStruct((n, d), x.dtype),
        grid=grid,
        in_specs=[pl.BlockSpec((tn, td), lambda i, j: (i, j))],
        out_specs=pl.BlockSpec((tn, td), lambda i, j: (i, j)),
        # No input_output_aliases: without caller-side donation the alias just
        # inserts a defensive full input copy, and it breaks if fused work
        # ever changes dtype or values.
        compiler_params=pltpu.CompilerParams(
            # Independent tiles on both axes.
            # TODO(synk): on v7x switch the row axis to pltpu.CORE_PARALLEL (or
            # pl.core_map over a 2-TC mesh) so both TensorCores each stream
            # half the rows, and consider 4 MiB blocks / pl.Buffered(3) with an
            # explicit vmem_limit_bytes; kept portable codegen here.
            dimension_semantics=("parallel", "parallel"),
        ),
    )(x2)


if __name__ == "__main__":
    key = jax.random.PRNGKey(0)

    # Small NCHW input consistent with a conv feature map: (2, 4, 16, 16).
    x = jax.random.normal(key, (2, 4, 16, 16), dtype=jnp.float32)
    ref = jnp.reshape(x, (x.shape[0], -1))

    # Default (optimal) path: pure reshape, no kernel.
    out_fast = flatten(x)
    jax.block_until_ready(out_fast)
    assert out_fast.shape == (2, 4 * 16 * 16) and out_fast.dtype == x.dtype
    assert bool(jnp.all(out_fast == ref))

    # Fusion-host Pallas path (run once, as required): lane-dense (n, d) copy.
    out_pallas = flatten_pallas(x)
    jax.block_until_ready(out_pallas)
    assert out_pallas.shape == (2, 4 * 16 * 16) and out_pallas.dtype == x.dtype
    assert bool(jnp.all(out_pallas == ref))

    # Packed dtype (bf16) — exercises the dtype-aware sublane minimum.
    xb = jax.random.normal(jax.random.PRNGKey(1), (2, 8, 16, 16), jnp.bfloat16)
    ob = flatten_pallas(xb)
    jax.block_until_ready(ob)
    assert ob.shape == (2, 8 * 16 * 16)
    assert bool(jnp.all(ob == jnp.reshape(xb, (2, -1))))

    # Multi-block + ragged rows (tiny block target forces a 2x2 grid with a
    # partial row tail) — exercises the tiled path without large inputs.
    xr = jax.random.normal(jax.random.PRNGKey(2), (10, 4, 16, 16), jnp.float32)
    orr = flatten_pallas(xr, target_block_bytes=16 * 1024)
    jax.block_until_ready(orr)
    assert orr.shape == (10, 4 * 16 * 16)
    assert bool(jnp.all(orr == jnp.reshape(xr, (10, -1))))

    # Non-lane-dense fallback (total feature dim % 128 != 0): pure reshape.
    x2 = jax.random.normal(jax.random.PRNGKey(3), (2, 3, 5, 7), jnp.float32)
    o2 = flatten_pallas(x2)
    jax.block_until_ready(o2)
    assert o2.shape == (2, 3 * 5 * 7)
    assert bool(jnp.all(o2 == jnp.reshape(x2, (2, -1))))

    print("KERNEL_OK")
</pallas_src>

<mosaic_0001>
module attributes {stable_mosaic.version = 11 : i64} {
  func.func @_copy_kernel(%arg0: i32, %arg1: i32, %arg2: memref<2x1024xf32, #tpu.memory_space<vmem>>, %arg3: memref<2x1024xf32, #tpu.memory_space<vmem>>) attributes {dimension_semantics = [#tpu.dimension_semantics<parallel>, #tpu.dimension_semantics<parallel>], iteration_bounds = array<i64: 1, 1>, scalar_prefetch = 0 : i64, scratch_operands = 0 : i64, tpu.core_type = #tpu.core_type<tc>, window_params = [{transform_indices = @transform_0, window_bounds = array<i64: 2, 1024>}, {transform_indices = @transform_1, window_bounds = array<i64: 2, 1024>}]} {
    %c0 = arith.constant 0 : index
    %c0_0 = arith.constant 0 : index
    %0 = vector.load %arg2[%c0, %c0_0] : memref<2x1024xf32, #tpu.memory_space<vmem>>, vector<2x1024xf32>
    %c0_1 = arith.constant 0 : index
    %c0_2 = arith.constant 0 : index
    %1 = vector.load %arg3[%c0_1, %c0_2] : memref<2x1024xf32, #tpu.memory_space<vmem>>, vector<2x1024xf32>
    tpu.vector_store %arg3[%c0_1, %c0_2], %0 {strides = array<i32>} : memref<2x1024xf32, #tpu.memory_space<vmem>>, vector<2x1024xf32>,
    return
  }
  func.func @transform_0(%arg0: i32, %arg1: i32) -> (i32, i32) {
    %c0_i32 = arith.constant 0 : i32
    return %arg0, %arg1 : i32, i32
  }
  func.func @transform_1(%arg0: i32, %arg1: i32) -> (i32, i32) {
    %c0_i32 = arith.constant 0 : i32
    return %arg0, %arg1 : i32, i32
  }
}

</mosaic_0001>

<llo_original>
// kernel: tpu_custom_call.1
$region0: #{tpu_custom_call.1}
  #allocation0 [shape = 'u32[]', space=smem, size = 0x4, offset = 0x4, fixed_abs, tag = 'smem constant byte address 0x4 - core index']
  #allocation1 [shape = 'u32[72,128]{1,0:T(1,128)}', space=vmem, size = 0x9000, scoped, tag = 'internal scratch']
  %s0 = inlined_call_operand.hbm [shape: f32[2,1024], index: 0, kind: input, shape index: {}]
  %s1 = inlined_call_operand.hbm [shape: f32[2,1024], index: 1, kind: output, shape index: {}]
  %s2 = sld [smem:[#allocation0]]
  $region18: #{tpu_custom_call.1} parent=0
    _
  %s4 = ssub.s32 1, %s2
  %s5 = scalar_select 0, %s4, %s2
  $region1: #{tpu_custom_call.1} parent=0
    #allocation2 [shape = 'u8[8192]{0}', space=vmem, size = 0x2000, scoped, tag = 'input window, operand 0, single buffered']
    #allocation3 [shape = 's32[1]{0}', space=sflag, size = 0x4, scoped, tag = 'scoped memory for tpu_custom_call.1']
    #allocation4 [shape = 's32[1]{0}', space=sflag, size = 0x4, scoped, tag = 'scoped memory for tpu_custom_call.1']
    #allocation5 [shape = 'u8[8192]{0}', space=vmem, size = 0x2000, scoped, tag = 'output window, operand 0, single buffered']
    %6 = vsyncpa [#allocation3], 0
    %7 = vsyncpa [#allocation4], 0
    // Predicated region
    $region2: #{tpu_custom_call.1} parent=1 // pred_check
      _
    $region3: #{tpu_custom_call.1} parent=1 // pred_check_branch
      %9 = sbr.rel (0) target = $region5
    $region4: #{tpu_custom_call.1} parent=1 // pred_region
      %11 = vsyncadd [#allocation3], 0
      %s13 = sshll.u32 %s0, 4
      %s14 = int_to_ptr.hbm [resolvable:$true] %s13
      %s15 = sshll.u32 [#allocation2], 4
      %s16 = int_to_ptr.vmem [resolvable:$true] %s15
      %18 = dma.hbm_to_vmem [thread:$0]  %s14, 256, %s16, [#allocation3]
    $region5: #{tpu_custom_call.1} parent=1 // pred_fallthru
      _
    // Predicated region
    $region6: #{tpu_custom_call.1} parent=1 // pred_check
      _
    $region7: #{tpu_custom_call.1} parent=1 // pred_check_branch
      %20 = sbr.rel (0) target = $region9
    $region8: #{tpu_custom_call.1} parent=1 // pred_region
      %22 = dma.done [#allocation3], 256
    $region9: #{tpu_custom_call.1} parent=1 // pred_fallthru
      _
    %v23 = vld [vmem:[#allocation2] sm:$0xff]
    %v24 = vld [vmem:[#allocation2 + $0x8] sm:$0xff]
    %25 = vst [vmem:[#allocation5] sm:$0xff] %v23
    %26 = vst [vmem:[#allocation5 + $0x8] sm:$0xff] %v24
    // Predicated region
    $region10: #{tpu_custom_call.1} parent=1 // pred_check
      _
    $region11: #{tpu_custom_call.1} parent=1 // pred_check_branch
      %28 = sbr.rel (0) target = $region13
    $region12: #{tpu_custom_call.1} parent=1 // pred_region
      %30 = vsyncadd [#allocation4], 0
      %s32 = sshll.u32 [#allocation5], 4
      %s33 = int_to_ptr.vmem [resolvable:$true] %s32
      %s34 = sshll.u32 %s1, 4
      %s35 = int_to_ptr.hbm [resolvable:$true] %s34
      %37 = dma.vmem_to_hbm [thread:$0]  %s33, 256, %s35, [#allocation4]
    $region13: #{tpu_custom_call.1} parent=1 // pred_fallthru
      _
    // Predicated region
    $region14: #{tpu_custom_call.1} parent=1 // pred_check
      _
    $region15: #{tpu_custom_call.1} parent=1 // pred_check_branch
      %39 = sbr.rel (0) target = $region17
    $region16: #{tpu_custom_call.1} parent=1 // pred_region
      %41 = dma.done [#allocation4], 256
    $region17: #{tpu_custom_call.1} parent=1 // pred_fallthru
      _
    %42 = vsyncpa [#allocation3], 1
    %43 = vsyncpa [#allocation4], 1

</llo_original>
